<compile_context>
chip_gen: v6e
topology: v6e:2x2x1
jax: 0.10.0
libtpu: 0.0.40
codegen_flags: <defaults>
</compile_context>

<pallas_src>
import math

import jax
import jax.numpy as jnp
from jax.experimental import pallas as pl
from jax.experimental.pallas import tpu as pltpu

IN_FEATURES = 28 * 28   # 784
NUM_CLASSES = 10
NPAD = 128              # weight's N padded to a full lane width for the MXU


def _linear_kernel(x_ref, w_ref, b_ref, o_ref):
    # x_ref: (TB, 784)  w_ref: (784, 128) [K, N]  b_ref: (1, 10)  o_ref: (TB, 10)
    acc = jnp.dot(x_ref[...], w_ref[...], preferred_element_type=jnp.float32)
    # Only the first NUM_CLASSES columns are real; the rest are zero-padded W.
    o_ref[...] = (acc[:, :NUM_CLASSES] + b_ref[...]).astype(o_ref.dtype)


def prepare_params(w, b):
    """One-time param prep.  w: [10, 784] (PyTorch [out, in] layout); b: [10].

    Returns a lane-dense [K, N] = [784, 128] RHS (zero-padded columns) and a
    2-D bias, so no per-step transpose/relayout happens inside the kernel.
    """
    w_kn = jnp.zeros((IN_FEATURES, NPAD), w.dtype).at[:, :NUM_CLASSES].set(w.T)
    b2d = b.reshape(1, NUM_CLASSES)
    return w_kn, b2d


def _pick_batch_tile(B, tile_b):
    """Batch tile: multiple of 8 (or the full batch for tiny B), capped at
    tile_b, and small enough that the grid has >= 2 tiles when B allows it
    (so v7x megacore can shard the batch axis across both TensorCores)."""
    if B <= 8:
        return B                                   # block == full batch dim
    half_up = ((pl.cdiv(B, 2) + 7) // 8) * 8       # >= 2 tiles when possible
    full_up = ((B + 7) // 8) * 8
    tb = min(tile_b, half_up, full_up)
    return max(8, (tb // 8) * 8)


def convnet_forward(x_nchw, w_kn, b2d, *, tile_b=2048):
    """x_nchw: [B, 1, 28, 28] float32; (w_kn, b2d) from prepare_params."""
    B = x_nchw.shape[0]
    x2d = x_nchw.reshape(B, IN_FEATURES)           # == torch x.view(-1, 784)

    TB = _pick_batch_tile(B, tile_b)
    grid = (pl.cdiv(B, TB),)

    out = pl.pallas_call(
        _linear_kernel,
        out_shape=jax.ShapeDtypeStruct((B, NUM_CLASSES), x2d.dtype),
        grid_spec=pl.GridSpec(
            grid=grid,
            in_specs=[
                pl.BlockSpec((TB, IN_FEATURES), lambda i: (i, 0)),    # x tile
                pl.BlockSpec((IN_FEATURES, NPAD), lambda i: (0, 0)),  # W resident
                pl.BlockSpec((1, NUM_CLASSES), lambda i: (0, 0)),     # b resident
            ],
            out_specs=pl.BlockSpec((TB, NUM_CLASSES), lambda i: (i, 0)),
        ),
        compiler_params=pltpu.CompilerParams(
            dimension_semantics=("parallel",),
            vmem_limit_bytes=32 * 1024 * 1024),
        cost_estimate=pl.CostEstimate(
            flops=2 * B * IN_FEATURES * NPAD,
            transcendentals=0,
            bytes_accessed=(B * IN_FEATURES * 4          # x read
                            + IN_FEATURES * NPAD * 4     # W read (resident)
                            + B * NUM_CLASSES * 4        # logits write
                            + NUM_CLASSES * 4)),         # bias read
    )(x2d, w_kn, b2d)

    return out


def init_params(key, num_classes=NUM_CLASSES, in_features=IN_FEATURES):
    # Deterministic init mimicking nn.Linear's default (uniform +- 1/sqrt(fan_in)).
    kw, kb = jax.random.split(key)
    bound = 1.0 / math.sqrt(in_features)
    w = jax.random.uniform(kw, (num_classes, in_features), jnp.float32,
                           minval=-bound, maxval=bound)
    b = jax.random.uniform(kb, (num_classes,), jnp.float32,
                           minval=-bound, maxval=bound)
    return w, b


if __name__ == "__main__":
    key = jax.random.PRNGKey(0)
    kx, kp = jax.random.split(key)

    batch = 2
    x = jax.random.normal(kx, (batch, 1, 28, 28), jnp.float32)   # NCHW like torch
    w, b = init_params(kp)

    w_kn, b2d = prepare_params(w, b)                 # one-time param prep
    fwd = jax.jit(convnet_forward)

    out = fwd(x, w_kn, b2d)
    out = jax.block_until_ready(out)

    # Sanity check against plain-JAX reference (torch: x.view(-1,784) @ W^T + b).
    ref = x.reshape(batch, -1) @ w.T + b
    assert out.shape == (batch, NUM_CLASSES)
    assert jnp.allclose(out, ref, atol=1e-5, rtol=1e-5)

    print("KERNEL_OK")
</pallas_src>

<mosaic_0001>
module attributes {stable_mosaic.version = 11 : i64} {
  func.func @_linear_kernel(%arg0: i32, %arg1: memref<2x784xf32, #tpu.memory_space<vmem>>, %arg2: memref<784x128xf32, #tpu.memory_space<vmem>>, %arg3: memref<1x10xf32, #tpu.memory_space<vmem>>, %arg4: memref<2x10xf32, #tpu.memory_space<vmem>>) attributes {dimension_semantics = [#tpu.dimension_semantics<parallel>], iteration_bounds = array<i64: 1>, scalar_prefetch = 0 : i64, scratch_operands = 0 : i64, tpu.core_type = #tpu.core_type<tc>, window_params = [{transform_indices = @transform_0, window_bounds = array<i64: 2, 784>}, {pipeline_mode = #tpu.pipeline_mode<synchronous>, transform_indices = @transform_1, window_bounds = array<i64: 784, 128>}, {pipeline_mode = #tpu.pipeline_mode<synchronous>, transform_indices = @transform_2, window_bounds = array<i64: 1, 10>}, {transform_indices = @transform_3, window_bounds = array<i64: 2, 10>}]} {
    %c0 = arith.constant 0 : index
    %c0_0 = arith.constant 0 : index
    %0 = vector.load %arg1[%c0, %c0_0] : memref<2x784xf32, #tpu.memory_space<vmem>>, vector<2x784xf32>
    %c0_1 = arith.constant 0 : index
    %c0_2 = arith.constant 0 : index
    %1 = vector.load %arg2[%c0_1, %c0_2] : memref<784x128xf32, #tpu.memory_space<vmem>>, vector<784x128xf32>
    %cst = arith.constant dense<0.000000e+00> : vector<2x128xf32>
    %2 = tpu.matmul %0, %1, %cst {dimension_numbers = #tpu.dot_dimension_numbers<[1], [0], [0], [1], [0, 0, 1, 1], [], []>} : vector<2x784xf32>, vector<784x128xf32>, vector<2x128xf32> -> vector<2x128xf32>
    %3 = vector.extract_strided_slice %2 {offsets = [0, 0], sizes = [2, 10], strides = [1, 1]} : vector<2x128xf32> to vector<2x10xf32>
    %c0_3 = arith.constant 0 : index
    %c0_4 = arith.constant 0 : index
    %4 = vector.load %arg3[%c0_3, %c0_4] : memref<1x10xf32, #tpu.memory_space<vmem>>, vector<1x10xf32>
    %5 = vector.broadcast %4 : vector<1x10xf32> to vector<2x10xf32>
    %6 = arith.addf %3, %5 : vector<2x10xf32>
    %c0_5 = arith.constant 0 : index
    %c0_6 = arith.constant 0 : index
    %7 = vector.load %arg4[%c0_5, %c0_6] : memref<2x10xf32, #tpu.memory_space<vmem>>, vector<2x10xf32>
    tpu.vector_store %arg4[%c0_5, %c0_6], %6 {strides = array<i32>} : memref<2x10xf32, #tpu.memory_space<vmem>>, vector<2x10xf32>,
    return
  }
  func.func @transform_0(%arg0: i32) -> (i32, i32) {
    %c0_i32 = arith.constant 0 : i32
    %c0_i32_0 = arith.constant 0 : i32
    return %arg0, %c0_i32 : i32, i32
  }
  func.func @transform_1(%arg0: i32) -> (i32, i32) {
    %c0_i32 = arith.constant 0 : i32
    %c0_i32_0 = arith.constant 0 : i32
    %c0_i32_1 = arith.constant 0 : i32
    return %c0_i32, %c0_i32_0 : i32, i32
  }
  func.func @transform_2(%arg0: i32) -> (i32, i32) {
    %c0_i32 = arith.constant 0 : i32
    %c0_i32_0 = arith.constant 0 : i32
    %c0_i32_1 = arith.constant 0 : i32
    return %c0_i32, %c0_i32_0 : i32, i32
  }
  func.func @transform_3(%arg0: i32) -> (i32, i32) {
    %c0_i32 = arith.constant 0 : i32
    %c0_i32_0 = arith.constant 0 : i32
    return %arg0, %c0_i32 : i32, i32
  }
}

</mosaic_0001>

<llo_original>
// kernel: convnet_forward.1
$region0: #{convnet_forward.1}
  #allocation0 [shape = 'u32[]', space=smem, size = 0x4, offset = 0x4, fixed_abs, tag = 'smem constant byte address 0x4 - core index']
  #allocation1 [shape = 'u32[144,128]{1,0:T(1,128)}', space=vmem, size = 0x12000, scoped, tag = 'internal scratch']
  %s0 = inlined_call_operand.vmem [shape: f32[2,784], index: 0, kind: input, shape index: {}]
  %s1 = inlined_call_operand.hbm [shape: f32[784,128], index: 1, kind: input, shape index: {}]
  %s2 = inlined_call_operand.vmem [shape: f32[1,10], index: 2, kind: input, shape index: {}]
  %s3 = inlined_call_operand.hbm [shape: f32[2,10], index: 3, kind: output, shape index: {}]
  %s4 = sld [smem:[#allocation0]]
  $region26: #{convnet_forward.1} parent=0
    _
  %s6 = ssub.s32 1, %s4
  %s7 = scalar_select 0, %s6, %s4
  $region1: #{convnet_forward.1} parent=0
    #allocation2 [shape = 'u8[401408]{0}', space=vmem, size = 0x62000, scoped, tag = 'input window, operand 1, single buffered']
    #allocation3 [shape = 's32[1]{0}', space=sflag, size = 0x4, scoped, tag = 'scoped memory for convnet_forward.1']
    #allocation4 [shape = 's32[1]{0}', space=sflag, size = 0x4, scoped, tag = 'scoped memory for convnet_forward.1']
    #allocation5 [shape = 'u8[1024]{0}', space=vmem, size = 0x400, scoped, tag = 'output window, operand 0, single buffered']
    %8 = vsyncpa [#allocation3], 0
    %9 = vsyncpa [#allocation4], 0
    // Predicated region
    $region2: #{convnet_forward.1} parent=1 // pred_check
      _
    $region3: #{convnet_forward.1} parent=1 // pred_check_branch
      %11 = sbr.rel (0) target = $region5
    $region4: #{convnet_forward.1} parent=1 // pred_region
      _
    $region5: #{convnet_forward.1} parent=1 // pred_fallthru
      _
    // Predicated region
    $region6: #{convnet_forward.1} parent=1 // pred_check
      _
    $region7: #{convnet_forward.1} parent=1 // pred_check_branch
      %13 = sbr.rel (0) target = $region9
    $region8: #{convnet_forward.1} parent=1 // pred_region
      %s15 = ssub.s32 12544, 12544
      %16 = vsyncadd [#allocation3], %s15
      %s17 = sshll.u32 [#allocation2], 4
      %s18 = int_to_ptr.vmem [resolvable:$true] %s17
      %23 = dma.hbm_to_vmem [thread:$0]  %s1, 12544, %s18, [#allocation3], 128, 128, 8
    $region9: #{convnet_forward.1} parent=1 // pred_fallthru
      _
    // Predicated region
    $region10: #{convnet_forward.1} parent=1 // pred_check
      _
    $region11: #{convnet_forward.1} parent=1 // pred_check_branch
      %25 = sbr.rel (0) target = $region13
    $region12: #{convnet_forward.1} parent=1 // pred_region
      _
    $region13: #{convnet_forward.1} parent=1 // pred_fallthru
      _
    // Predicated region
    $region14: #{convnet_forward.1} parent=1 // pred_check
      _
    $region15: #{convnet_forward.1} parent=1 // pred_check_branch
      %27 = sbr.rel (0) target = $region17
    $region16: #{convnet_forward.1} parent=1 // pred_region
      %28 = dma.done [#allocation3], 12544
    $region17: #{convnet_forward.1} parent=1 // pred_fallthru
      _
    %v29 = vld [vmem:[%s0] sm:$0xff]
    %v30 = vld [vmem:[%s0 + $0x8] sm:$0x3f]
    %v31 = vld [vmem:[#allocation2] sm:$0xff]
    %v32 = vld [vmem:[#allocation2 + $0x8] sm:$0xff]
    %v33 = vld [vmem:[#allocation2 + $0x10] sm:$0xff]
    %v34 = vld [vmem:[#allocation2 + $0x18] sm:$0xff]
    %v35 = vld [vmem:[#allocation2 + $0x20] sm:$0xff]
    %v36 = vld [vmem:[#allocation2 + $0x28] sm:$0xff]
    %v37 = vld [vmem:[#allocation2 + $0x30] sm:$0xff]
    %v38 = vld [vmem:[#allocation2 + $0x38] sm:$0xff]
    %v39 = vld [vmem:[#allocation2 + $0x40] sm:$0xff]
    %v40 = vld [vmem:[#allocation2 + $0x48] sm:$0xff]
    %v41 = vld [vmem:[#allocation2 + $0x50] sm:$0xff]
    %v42 = vld [vmem:[#allocation2 + $0x58] sm:$0xff]
    %v43 = vld [vmem:[#allocation2 + $0x60] sm:$0xff]
    %v44 = vld [vmem:[#allocation2 + $0x68] sm:$0xff]
    %v45 = vld [vmem:[#allocation2 + $0x70] sm:$0xff]
    %v46 = vld [vmem:[#allocation2 + $0x78] sm:$0xff]
    %v47 = vld [vmem:[#allocation2 + $0x80] sm:$0xff]
    %v48 = vld [vmem:[#allocation2 + $0x88] sm:$0xff]
    %v49 = vld [vmem:[#allocation2 + $0x90] sm:$0xff]
    %v50 = vld [vmem:[#allocation2 + $0x98] sm:$0xff]
    %v51 = vld [vmem:[#allocation2 + $0xa0] sm:$0xff]
    %v52 = vld [vmem:[#allocation2 + $0xa8] sm:$0xff]
    %v53 = vld [vmem:[#allocation2 + $0xb0] sm:$0xff]
    %v54 = vld [vmem:[#allocation2 + $0xb8] sm:$0xff]
    %v55 = vld [vmem:[#allocation2 + $0xc0] sm:$0xff]
    %v56 = vld [vmem:[#allocation2 + $0xc8] sm:$0xff]
    %v57 = vld [vmem:[#allocation2 + $0xd0] sm:$0xff]
    %v58 = vld [vmem:[#allocation2 + $0xd8] sm:$0xff]
    %v59 = vld [vmem:[#allocation2 + $0xe0] sm:$0xff]
    %v60 = vld [vmem:[#allocation2 + $0xe8] sm:$0xff]
    %v61 = vld [vmem:[#allocation2 + $0xf0] sm:$0xff]
    %v62 = vld [vmem:[#allocation2 + $0xf8] sm:$0xff]
    %v63 = vld [vmem:[#allocation2 + $0x100] sm:$0xff]
    %v64 = vld [vmem:[#allocation2 + $0x108] sm:$0xff]
    %v65 = vld [vmem:[#allocation2 + $0x110] sm:$0xff]
    %v66 = vld [vmem:[#allocation2 + $0x118] sm:$0xff]
    %v67 = vld [vmem:[#allocation2 + $0x120] sm:$0xff]
    %v68 = vld [vmem:[#allocation2 + $0x128] sm:$0xff]
    %v69 = vld [vmem:[#allocation2 + $0x130] sm:$0xff]
    %v70 = vld [vmem:[#allocation2 + $0x138] sm:$0xff]
    %v71 = vld [vmem:[#allocation2 + $0x140] sm:$0xff]
    %v72 = vld [vmem:[#allocation2 + $0x148] sm:$0xff]
    %v73 = vld [vmem:[#allocation2 + $0x150] sm:$0xff]
    %v74 = vld [vmem:[#allocation2 + $0x158] sm:$0xff]
    %v75 = vld [vmem:[#allocation2 + $0x160] sm:$0xff]
    %v76 = vld [vmem:[#allocation2 + $0x168] sm:$0xff]
    %v77 = vld [vmem:[#allocation2 + $0x170] sm:$0xff]
    %v78 = vld [vmem:[#allocation2 + $0x178] sm:$0xff]
    %v79 = vld [vmem:[#allocation2 + $0x180] sm:$0xff]
    %v80 = vld [vmem:[#allocation2 + $0x188] sm:$0xff]
    %v81 = vld [vmem:[#allocation2 + $0x190] sm:$0xff]
    %v82 = vld [vmem:[#allocation2 + $0x198] sm:$0xff]
    %v83 = vld [vmem:[#allocation2 + $0x1a0] sm:$0xff]
    %v84 = vld [vmem:[#allocation2 + $0x1a8] sm:$0xff]
    %v85 = vld [vmem:[#allocation2 + $0x1b0] sm:$0xff]
    %v86 = vld [vmem:[#allocation2 + $0x1b8] sm:$0xff]
    %v87 = vld [vmem:[#allocation2 + $0x1c0] sm:$0xff]
    %v88 = vld [vmem:[#allocation2 + $0x1c8] sm:$0xff]
    %v89 = vld [vmem:[#allocation2 + $0x1d0] sm:$0xff]
    %v90 = vld [vmem:[#allocation2 + $0x1d8] sm:$0xff]
    %v91 = vld [vmem:[#allocation2 + $0x1e0] sm:$0xff]
    %v92 = vld [vmem:[#allocation2 + $0x1e8] sm:$0xff]
    %v93 = vld [vmem:[#allocation2 + $0x1f0] sm:$0xff]
    %v94 = vld [vmem:[#allocation2 + $0x1f8] sm:$0xff]
    %v95 = vld [vmem:[#allocation2 + $0x200] sm:$0xff]
    %v96 = vld [vmem:[#allocation2 + $0x208] sm:$0xff]
    %v97 = vld [vmem:[#allocation2 + $0x210] sm:$0xff]
    %v98 = vld [vmem:[#allocation2 + $0x218] sm:$0xff]
    %v99 = vld [vmem:[#allocation2 + $0x220] sm:$0xff]
    %v100 = vld [vmem:[#allocation2 + $0x228] sm:$0xff]
    %v101 = vld [vmem:[#allocation2 + $0x230] sm:$0xff]
    %v102 = vld [vmem:[#allocation2 + $0x238] sm:$0xff]
    %v103 = vld [vmem:[#allocation2 + $0x240] sm:$0xff]
    %v104 = vld [vmem:[#allocation2 + $0x248] sm:$0xff]
    %v105 = vld [vmem:[#allocation2 + $0x250] sm:$0xff]
    %v106 = vld [vmem:[#allocation2 + $0x258] sm:$0xff]
    %v107 = vld [vmem:[#allocation2 + $0x260] sm:$0xff]
    %v108 = vld [vmem:[#allocation2 + $0x268] sm:$0xff]
    %v109 = vld [vmem:[#allocation2 + $0x270] sm:$0xff]
    %v110 = vld [vmem:[#allocation2 + $0x278] sm:$0xff]
    %v111 = vld [vmem:[#allocation2 + $0x280] sm:$0xff]
    %v112 = vld [vmem:[#allocation2 + $0x288] sm:$0xff]
    %v113 = vld [vmem:[#allocation2 + $0x290] sm:$0xff]
    %v114 = vld [vmem:[#allocation2 + $0x298] sm:$0xff]
    %v115 = vld [vmem:[#allocation2 + $0x2a0] sm:$0xff]
    %v116 = vld [vmem:[#allocation2 + $0x2a8] sm:$0xff]
    %v117 = vld [vmem:[#allocation2 + $0x2b0] sm:$0xff]
    %v118 = vld [vmem:[#allocation2 + $0x2b8] sm:$0xff]
    %v119 = vld [vmem:[#allocation2 + $0x2c0] sm:$0xff]
    %v120 = vld [vmem:[#allocation2 + $0x2c8] sm:$0xff]
    %v121 = vld [vmem:[#allocation2 + $0x2d0] sm:$0xff]
    %v122 = vld [vmem:[#allocation2 + $0x2d8] sm:$0xff]
    %v123 = vld [vmem:[#allocation2 + $0x2e0] sm:$0xff]
    %v124 = vld [vmem:[#allocation2 + $0x2e8] sm:$0xff]
    %v125 = vld [vmem:[#allocation2 + $0x2f0] sm:$0xff]
    %v126 = vld [vmem:[#allocation2 + $0x2f8] sm:$0xff]
    %v127 = vld [vmem:[#allocation2 + $0x300] sm:$0xff]
    %v128 = vld [vmem:[#allocation2 + $0x308] sm:$0xff]
    %v131 = vcombine.high %v29, %v29
    %v133 = vunpack.c.l.s4 1983009808
    %v134 = vunpack.c.0.s8 %v133
    %v135 = vlaneseq
    %v136 = vshrl.u32 %v135, 7
    %v137 = vsub.s32 %v134, %v136
    %v138 = vrot.slane %v29, %v137
    %v140 = vunpack.c.l.s4 1983009808
    %v141 = vunpack.c.0.s8 %v140
    %v142 = vlaneseq
    %v143 = vshrl.u32 %v142, 7
    %v144 = vsub.s32 %v141, %v143
    %v145 = vrot.slane %v131, %v144
    %v146 = vcombine.high %v138, %v138
    %v147 = vcombine.high %v145, %v145
    %v148 = vcombine.high %v30, %v30
    %v150 = vunpack.c.l.s4 1983009808
    %v151 = vunpack.c.0.s8 %v150
    %v152 = vlaneseq
    %v153 = vshrl.u32 %v152, 7
    %v154 = vsub.s32 %v151, %v153
    %v155 = vrot.slane %v30, %v154
    %v157 = vunpack.c.l.s4 1983009808
    %v158 = vunpack.c.0.s8 %v157
    %v159 = vlaneseq
    %v160 = vshrl.u32 %v159, 7
    %v161 = vsub.s32 %v158, %v160
    %v162 = vrot.slane %v148, %v161
    %v163 = vcombine.high %v155, %v155
    %vm170 = vcmask 130048
    %v171 = vsel %vm170, %v162, 0
    %173 = vmatprep.subr.mxu0 0.0
    %174 = vmatpush1.msra.mxu0 %v46
    %175 = vmatprep.subr.mxu0 0.0
    %176 = vmatpush1.msra.mxu0 %v45
    %177 = vmatprep.subr.mxu0 0.0
    %178 = vmatpush1.msra.mxu0 %v44
    %179 = vmatprep.subr.mxu0 0.0
    %180 = vmatpush1.msra.mxu0 %v43
    %181 = vmatprep.subr.mxu0 0.0
    %182 = vmatpush1.msra.mxu0 %v42
    %183 = vmatprep.subr.mxu0 0.0
    %184 = vmatpush1.msra.mxu0 %v41
    %185 = vmatprep.subr.mxu0 0.0
    %186 = vmatpush1.msra.mxu0 %v40
    %187 = vmatprep.subr.mxu0 0.0
    %188 = vmatpush1.msra.mxu0 %v39
    %189 = vmatprep.subr.mxu0 0.0
    %190 = vmatpush1.msra.mxu0 %v38
    %191 = vmatprep.subr.mxu0 0.0
    %192 = vmatpush1.msra.mxu0 %v37
    %193 = vmatprep.subr.mxu0 0.0
    %194 = vmatpush1.msra.mxu0 %v36
    %195 = vmatprep.subr.mxu0 0.0
    %196 = vmatpush1.msra.mxu0 %v35
    %197 = vmatprep.subr.mxu0 0.0
    %198 = vmatpush1.msra.mxu0 %v34
    %199 = vmatprep.subr.mxu0 0.0
    %200 = vmatpush1.msra.mxu0 %v33
    %201 = vmatprep.subr.mxu0 0.0
    %202 = vmatpush1.msra.mxu0 %v32
    %203 = vmatprep.subr.mxu0 0.0
    %204 = vmatpush1.msra.mxu0 %v31
    %205 = vmatprep.subr.mxu0 0.0
    %206 = vmatpush2.msra.mxu0 %v62
    %207 = vmatprep.subr.mxu0 0.0
    %208 = vmatpush2.msra.mxu0 %v61
    %209 = vmatprep.subr.mxu0 0.0
    %210 = vmatpush2.msra.mxu0 %v60
    %211 = vmatprep.subr.mxu0 0.0
    %212 = vmatpush2.msra.mxu0 %v59
    %213 = vmatprep.subr.mxu0 0.0
    %214 = vmatpush2.msra.mxu0 %v58
    %215 = vmatprep.subr.mxu0 0.0
    %216 = vmatpush2.msra.mxu0 %v57
    %217 = vmatprep.subr.mxu0 0.0
    %218 = vmatpush2.msra.mxu0 %v56
    %219 = vmatprep.subr.mxu0 0.0
    %220 = vmatpush2.msra.mxu0 %v55
    %221 = vmatprep.subr.mxu0 0.0
    %222 = vmatpush2.msra.mxu0 %v54
    %223 = vmatprep.subr.mxu0 0.0
    %224 = vmatpush2.msra.mxu0 %v53
    %225 = vmatprep.subr.mxu0 0.0
    %226 = vmatpush2.msra.mxu0 %v52
    %227 = vmatprep.subr.mxu0 0.0
    %228 = vmatpush2.msra.mxu0 %v51
    %229 = vmatprep.subr.mxu0 0.0
    %230 = vmatpush2.msra.mxu0 %v50
    %231 = vmatprep.subr.mxu0 0.0
    %232 = vmatpush2.msra.mxu0 %v49
    %233 = vmatprep.subr.mxu0 0.0
    %234 = vmatpush2.msra.mxu0 %v48
    %235 = vmatprep.subr.mxu0 0.0
    %236 = vmatpush2.msra.mxu0 %v47
    %237 = vmatprep.mubr.f32.mxu0 %v146
    %238 = vmatmul.mubr.f32.gmra.mxu0 %v138
    %v239 = vpop.f32.mrf.mxu0
    %v240 = vadd.f32 0.0, %v239
    %v241 = vpop.f32.mrf.mxu0
    %242 = vdwg.mxu0
    %243 = vmatprep.subr.mxu0 0.0
    %244 = vmatpush1.msra.mxu0 %v78
    %245 = vmatprep.subr.mxu0 0.0
    %246 = vmatpush1.msra.mxu0 %v77
    %247 = vmatprep.subr.mxu0 0.0
    %248 = vmatpush1.msra.mxu0 %v76
    %249 = vmatprep.subr.mxu0 0.0
    %250 = vmatpush1.msra.mxu0 %v75
    %251 = vmatprep.subr.mxu0 0.0
    %252 = vmatpush1.msra.mxu0 %v74
    %253 = vmatprep.subr.mxu0 0.0
    %254 = vmatpush1.msra.mxu0 %v73
    %255 = vmatprep.subr.mxu0 0.0
    %256 = vmatpush1.msra.mxu0 %v72
    %257 = vmatprep.subr.mxu0 0.0
    %258 = vmatpush1.msra.mxu0 %v71
    %259 = vmatprep.subr.mxu0 0.0
    %260 = vmatpush1.msra.mxu0 %v70
    %261 = vmatprep.subr.mxu0 0.0
    %262 = vmatpush1.msra.mxu0 %v69
    %263 = vmatprep.subr.mxu0 0.0
    %264 = vmatpush1.msra.mxu0 %v68
    %265 = vmatprep.subr.mxu0 0.0
    %266 = vmatpush1.msra.mxu0 %v67
    %267 = vmatprep.subr.mxu0 0.0
    %268 = vmatpush1.msra.mxu0 %v66
    %269 = vmatprep.subr.mxu0 0.0
    %270 = vmatpush1.msra.mxu0 %v65
    %271 = vmatprep.subr.mxu0 0.0
    %272 = vmatpush1.msra.mxu0 %v64
    %273 = vmatprep.subr.mxu0 0.0
    %274 = vmatpush1.msra.mxu0 %v63
    %275 = vmatprep.subr.mxu0 0.0
    %276 = vmatpush2.msra.mxu0 %v94
    %277 = vmatprep.subr.mxu0 0.0
    %278 = vmatpush2.msra.mxu0 %v93
    %279 = vmatprep.subr.mxu0 0.0
    %280 = vmatpush2.msra.mxu0 %v92
    %281 = vmatprep.subr.mxu0 0.0
    %282 = vmatpush2.msra.mxu0 %v91
    %283 = vmatprep.subr.mxu0 0.0
    %284 = vmatpush2.msra.mxu0 %v90
    %285 = vmatprep.subr.mxu0 0.0
    %286 = vmatpush2.msra.mxu0 %v89
    %287 = vmatprep.subr.mxu0 0.0
    %288 = vmatpush2.msra.mxu0 %v88
    %289 = vmatprep.subr.mxu0 0.0
    %290 = vmatpush2.msra.mxu0 %v87
    %291 = vmatprep.subr.mxu0 0.0
    %292 = vmatpush2.msra.mxu0 %v86
    %293 = vmatprep.subr.mxu0 0.0
    %294 = vmatpush2.msra.mxu0 %v85
    %295 = vmatprep.subr.mxu0 0.0
    %296 = vmatpush2.msra.mxu0 %v84
    %297 = vmatprep.subr.mxu0 0.0
    %298 = vmatpush2.msra.mxu0 %v83
    %299 = vmatprep.subr.mxu0 0.0
    %300 = vmatpush2.msra.mxu0 %v82
    %301 = vmatprep.subr.mxu0 0.0
    %302 = vmatpush2.msra.mxu0 %v81
    %303 = vmatprep.subr.mxu0 0.0
    %304 = vmatpush2.msra.mxu0 %v80
    %305 = vmatprep.subr.mxu0 0.0
    %306 = vmatpush2.msra.mxu0 %v79
    %307 = vmatprep.mubr.f32.mxu0 %v147
    %308 = vmatmul.mubr.f32.gmra.mxu0 %v145
    %v309 = vpop.f32.mrf.mxu0
    %v310 = vadd.f32 %v240, %v309
    %v311 = vpop.f32.mrf.mxu0
    %312 = vdwg.mxu0
    %313 = vmatprep.subr.mxu0 0.0
    %314 = vmatpush1.msra.mxu0 %v110
    %315 = vmatprep.subr.mxu0 0.0
    %316 = vmatpush1.msra.mxu0 %v109
    %317 = vmatprep.subr.mxu0 0.0
    %318 = vmatpush1.msra.mxu0 %v108
    %319 = vmatprep.subr.mxu0 0.0
    %320 = vmatpush1.msra.mxu0 %v107
    %321 = vmatprep.subr.mxu0 0.0
    %322 = vmatpush1.msra.mxu0 %v106
    %323 = vmatprep.subr.mxu0 0.0
    %324 = vmatpush1.msra.mxu0 %v105
    %325 = vmatprep.subr.mxu0 0.0
    %326 = vmatpush1.msra.mxu0 %v104
    %327 = vmatprep.subr.mxu0 0.0
    %328 = vmatpush1.msra.mxu0 %v103
    %329 = vmatprep.subr.mxu0 0.0
    %330 = vmatpush1.msra.mxu0 %v102
    %331 = vmatprep.subr.mxu0 0.0
    %332 = vmatpush1.msra.mxu0 %v101
    %333 = vmatprep.subr.mxu0 0.0
    %334 = vmatpush1.msra.mxu0 %v100
    %335 = vmatprep.subr.mxu0 0.0
    %336 = vmatpush1.msra.mxu0 %v99
    %337 = vmatprep.subr.mxu0 0.0
    %338 = vmatpush1.msra.mxu0 %v98
    %339 = vmatprep.subr.mxu0 0.0
    %340 = vmatpush1.msra.mxu0 %v97
    %341 = vmatprep.subr.mxu0 0.0
    %342 = vmatpush1.msra.mxu0 %v96
    %343 = vmatprep.subr.mxu0 0.0
    %344 = vmatpush1.msra.mxu0 %v95
    %345 = vmatprep.subr.mxu0 0.0
    %346 = vmatpush2.msra.mxu0 %v126
    %347 = vmatprep.subr.mxu0 0.0
    %348 = vmatpush2.msra.mxu0 %v125
    %349 = vmatprep.subr.mxu0 0.0
    %350 = vmatpush2.msra.mxu0 %v124
    %351 = vmatprep.subr.mxu0 0.0
    %352 = vmatpush2.msra.mxu0 %v123
    %353 = vmatprep.subr.mxu0 0.0
    %354 = vmatpush2.msra.mxu0 %v122
    %355 = vmatprep.subr.mxu0 0.0
    %356 = vmatpush2.msra.mxu0 %v121
    %357 = vmatprep.subr.mxu0 0.0
    %358 = vmatpush2.msra.mxu0 %v120
    %359 = vmatprep.subr.mxu0 0.0
    %360 = vmatpush2.msra.mxu0 %v119
    %361 = vmatprep.subr.mxu0 0.0
    %362 = vmatpush2.msra.mxu0 %v118
    %363 = vmatprep.subr.mxu0 0.0
    %364 = vmatpush2.msra.mxu0 %v117
    %365 = vmatprep.subr.mxu0 0.0
    %366 = vmatpush2.msra.mxu0 %v116
    %367 = vmatprep.subr.mxu0 0.0
    %368 = vmatpush2.msra.mxu0 %v115
    %369 = vmatprep.subr.mxu0 0.0
    %370 = vmatpush2.msra.mxu0 %v114
    %371 = vmatprep.subr.mxu0 0.0
    %372 = vmatpush2.msra.mxu0 %v113
    %373 = vmatprep.subr.mxu0 0.0
    %374 = vmatpush2.msra.mxu0 %v112
    %375 = vmatprep.subr.mxu0 0.0
    %376 = vmatpush2.msra.mxu0 %v111
    %377 = vmatprep.mubr.f32.mxu0 %v163
    %378 = vmatmul.mubr.f32.gmra.mxu0 %v155
    %v379 = vpop.f32.mrf.mxu0
    %v380 = vadd.f32 %v310, %v379
    %v381 = vpop.f32.mrf.mxu0
    %382 = vdwg.mxu0
    %383 = vmatprep.subr.mxu0 0.0
    %384 = vmatpush1.msra.mxu0 0.0
    %385 = vmatprep.subr.mxu0 0.0
    %386 = vmatpush1.msra.mxu0 0.0
    %387 = vmatprep.subr.mxu0 0.0
    %388 = vmatpush1.msra.mxu0 0.0
    %389 = vmatprep.subr.mxu0 0.0
    %390 = vmatpush1.msra.mxu0 0.0
    %391 = vmatprep.subr.mxu0 0.0
    %392 = vmatpush1.msra.mxu0 0.0
    %393 = vmatprep.subr.mxu0 0.0
    %394 = vmatpush1.msra.mxu0 0.0
    %395 = vmatprep.subr.mxu0 0.0
    %396 = vmatpush1.msra.mxu0 0.0
    %397 = vmatprep.subr.mxu0 0.0
    %398 = vmatpush1.msra.mxu0 0.0
    %399 = vmatprep.subr.mxu0 0.0
    %400 = vmatpush1.msra.mxu0 0.0
    %401 = vmatprep.subr.mxu0 0.0
    %402 = vmatpush1.msra.mxu0 0.0
    %403 = vmatprep.subr.mxu0 0.0
    %404 = vmatpush1.msra.mxu0 0.0
    %405 = vmatprep.subr.mxu0 0.0
    %406 = vmatpush1.msra.mxu0 0.0
    %407 = vmatprep.subr.mxu0 0.0
    %408 = vmatpush1.msra.mxu0 0.0
    %409 = vmatprep.subr.mxu0 0.0
    %410 = vmatpush1.msra.mxu0 0.0
    %411 = vmatprep.subr.mxu0 0.0
    %412 = vmatpush1.msra.mxu0 %v128
    %413 = vmatprep.subr.mxu0 0.0
    %414 = vmatpush1.msra.mxu0 %v127
    %415 = vmatprep.subr.mxu0 0.0
    %416 = vmatpush2.msra.mxu0 0.0
    %417 = vmatprep.subr.mxu0 0.0
    %418 = vmatpush2.msra.mxu0 0.0
    %419 = vmatprep.subr.mxu0 0.0
    %420 = vmatpush2.msra.mxu0 0.0
    %421 = vmatprep.subr.mxu0 0.0
    %422 = vmatpush2.msra.mxu0 0.0
    %423 = vmatprep.subr.mxu0 0.0
    %424 = vmatpush2.msra.mxu0 0.0
    %425 = vmatprep.subr.mxu0 0.0
    %426 = vmatpush2.msra.mxu0 0.0
    %427 = vmatprep.subr.mxu0 0.0
    %428 = vmatpush2.msra.mxu0 0.0
    %429 = vmatprep.subr.mxu0 0.0
    %430 = vmatpush2.msra.mxu0 0.0
    %431 = vmatprep.subr.mxu0 0.0
    %432 = vmatpush2.msra.mxu0 0.0
    %433 = vmatprep.subr.mxu0 0.0
    %434 = vmatpush2.msra.mxu0 0.0
    %435 = vmatprep.subr.mxu0 0.0
    %436 = vmatpush2.msra.mxu0 0.0
    %437 = vmatprep.subr.mxu0 0.0
    %438 = vmatpush2.msra.mxu0 0.0
    %439 = vmatprep.subr.mxu0 0.0
    %440 = vmatpush2.msra.mxu0 0.0
    %441 = vmatprep.subr.mxu0 0.0
    %442 = vmatpush2.msra.mxu0 0.0
    %443 = vmatprep.subr.mxu0 0.0
    %444 = vmatpush2.msra.mxu0 0.0
    %445 = vmatprep.subr.mxu0 0.0
    %446 = vmatpush2.msra.mxu0 0.0
    %447 = vmatprep.mubr.f32.mxu0 0.0
    %448 = vmatmul.mubr.f32.gmra.mxu0 %v171
    %v449 = vpop.f32.mrf.mxu0
    %v450 = vadd.f32 %v380, %v449
    %v451 = vpop.f32.mrf.mxu0
    %452 = vdwg.mxu0
    %v453 = vld [vmem:[%s2] sm:$0x1]
    %v455 = vlaneseq
    %v456 = vshrl.u32 %v455, 7
    %v457 = vsub.s32 0, %v456
    %v458 = vrot.slane %v453, %v457
    %v460 = vadd.f32 %v450, %v458
    %vm461 = vcmask 74752
    %462 = vst.msk [vmem:[#allocation5] sm:$0x3] %vm461, %v460
    // Predicated region
    $region18: #{convnet_forward.1} parent=1 // pred_check
      _
    $region19: #{convnet_forward.1} parent=1 // pred_check_branch
      %464 = sbr.rel (0) target = $region21
    $region20: #{convnet_forward.1} parent=1 // pred_region
      %s466 = ssub.s32 32, 32
      %467 = vsyncadd [#allocation4], %s466
      %s469 = sshll.u32 [#allocation5], 4
      %s470 = int_to_ptr.vmem [resolvable:$true] %s469
      %472 = dma.vmem_to_hbm [thread:$0]  %s470, 32, %s3, [#allocation4]
    $region21: #{convnet_forward.1} parent=1 // pred_fallthru
      _
    // Predicated region
    $region22: #{convnet_forward.1} parent=1 // pred_check
      _
    $region23: #{convnet_forward.1} parent=1 // pred_check_branch
      %474 = sbr.rel (0) target = $region25
    $region24: #{convnet_forward.1} parent=1 // pred_region
      %475 = dma.done [#allocation4], 32
    $region25: #{convnet_forward.1} parent=1 // pred_fallthru
      _
    %476 = vsyncpa [#allocation3], 1
    %477 = vsyncpa [#allocation4], 1

</llo_original>
